<compile_context>
chip_gen: v6e
topology: v6e:2x2x1
jax: 0.10.0
libtpu: 0.0.40
codegen_flags: <defaults>
</compile_context>

<pallas_src>
import functools
import math

import jax
import jax.numpy as jnp
from jax import lax
from jax.experimental import pallas as pl
from jax.experimental.pallas import tpu as pltpu


def _tpu_hw_info():
    """Best-effort (num_tensorcores, vmem_capacity_bytes) with safe fallbacks."""
    cores, vmem_cap = 1, 64 * 1024 * 1024           # v7x has the smallest VMEM
    try:
        info = pltpu.get_tpu_info()
    except Exception:
        return cores, vmem_cap
    for attr in ("num_cores", "num_tensorcores", "tensor_cores_per_chip",
                 "tensorcores_per_chip", "cores_per_chip"):
        v = getattr(info, attr, None)
        if isinstance(v, int) and v > 0:
            cores = v
            break
    v = getattr(info, "vmem_capacity_bytes", None)
    if isinstance(v, int) and v > 0:
        vmem_cap = v
    return cores, vmem_cap


def _sc_loss_kernel(x_ref, y_ref, o_ref, num_acc, den_acc, *,
                    rows, tile_rows, inner_rows, n_inner,
                    tiles_per_chunk, n_tiles, needs_mask):
    """Accumulate ||y-x||^2 and ||y||^2 partials for one parallel chunk."""
    i = pl.program_id(0)          # parallel chunk (megacore axis)
    k = pl.program_id(1)          # reduction step within the chunk
    t = i * tiles_per_chunk + k   # logical tile index

    @pl.when(k == 0)
    def _():
        num_acc[...] = jnp.zeros_like(num_acc)
        den_acc[...] = jnp.zeros_like(den_acc)

    def slice_step(it, masked):
        # Stream one (inner_rows, F) slice: load -> f32 upcast -> sub ->
        # square -> accumulate.  Keeps live data to a handful of vregs plus a
        # small accumulator tile; no tile-sized f32 temporaries in VMEM.
        r0 = it * inner_rows
        if not isinstance(r0, int):
            r0 = pl.multiple_of(r0, inner_rows)
        x = x_ref[pl.ds(r0, inner_rows), :].astype(jnp.float32)
        y = y_ref[pl.ds(r0, inner_rows), :].astype(jnp.float32)
        d = y - x
        if masked:
            # (inner_rows, 1) row mask; jnp.where broadcasts across lanes.
            row_g = (t * tile_rows + r0
                     + lax.broadcasted_iota(jnp.int32, (inner_rows, 1), 0))
            valid = row_g < rows
            d = jnp.where(valid, d, 0.0)
            y = jnp.where(valid, y, 0.0)
        num_acc[...] += d * d
        den_acc[...] += y * y

    def accumulate(masked):
        if n_inner == 1:
            slice_step(0, masked)
        else:
            lax.fori_loop(0, n_inner,
                          lambda it, c: (slice_step(it, masked), c)[1], 0)

    if needs_mask:
        # Masking lives off the hot path: only the last logical tile and any
        # clamped padding steps pay for the iota/compare/select.
        @pl.when(t < n_tiles - 1)
        def _():
            accumulate(False)

        @pl.when(t >= n_tiles - 1)
        def _():
            accumulate(True)
    else:
        accumulate(False)

    @pl.when(k == pl.num_programs(1) - 1)
    def _():
        # Single cross-lane reduction per chunk, only at the very end.
        o_ref[0, 0] = jnp.sum(num_acc[...])
        o_ref[0, 1] = jnp.sum(den_acc[...])


def spectral_convergence_loss(x_mag: jax.Array, y_mag: jax.Array, *,
                              target_block_bytes: int = 6 * 1024 * 1024,
                              num_parallel: int | None = None,
                              vmem_limit_bytes: int | None = None) -> jax.Array:
    """Pallas implementation of SpectralConvergenceLoss.forward.

    Args:
        x_mag: predicted magnitude spectrogram, shape (B, #frames, #freq_bins).
        y_mag: target    magnitude spectrogram, same shape.
        target_block_bytes: approximate per-input VMEM block size (lane-padded).
        num_parallel: leading parallel grid size; defaults to the detected
            TensorCore count (2 on v7x megacore, 1 on v5e/v6e).
        vmem_limit_bytes: scoped-VMEM limit to request; defaults to
            min(48 MiB, 3/4 of physical VMEM).

    Returns:
        Scalar float32 loss.  Like the PyTorch reference, returns NaN/Inf if
        ||y_mag||_F == 0.
    """
    assert x_mag.shape == y_mag.shape, "x_mag / y_mag shape mismatch"
    assert x_mag.ndim >= 2, "expected at least (frames, freq_bins)"
    *lead, F = x_mag.shape
    rows = int(math.prod(lead))
    x2 = x_mag.reshape(rows, F)
    y2 = y_mag.reshape(rows, F)

    cores, vmem_cap = _tpu_hw_info()
    if num_parallel is None:
        num_parallel = cores
    if vmem_limit_bytes is None:
        # Raise the scoped-VMEM limit so the large streaming blocks fit:
        # 48 MiB on 128 MiB chips (v5e/v6e), 3/4 of v7x's 64 MiB.
        vmem_limit_bytes = min(48 * 1024 * 1024, (vmem_cap * 3) // 4)

    itemsize = jnp.dtype(x_mag.dtype).itemsize
    # Lane-padded F: freq bins round up to multiples of 128 lanes in VMEM, so
    # budget blocks with F_pad rather than F (matters for 257/513/1025 bins).
    F_pad = pl.cdiv(F, 128) * 128
    # Sublane packing granularity: 8 (f32), 16 (bf16), 32 (int8/fp8).
    pack = (4 // max(1, itemsize)) * 8
    rows_pad = pl.cdiv(rows, pack) * pack

    # Keep 2 inputs x 2 pipeline buffers x block (+ accumulators/temps) inside
    # the requested scoped-VMEM limit with headroom.
    max_block = max(64 * 1024, (vmem_limit_bytes - 4 * 1024 * 1024) // 4)
    block_bytes = min(target_block_bytes, max_block)

    tile_rows = max(pack, (block_bytes // (F_pad * itemsize)) // pack * pack)
    tile_rows = min(tile_rows, rows_pad)
    INNER = 128                        # rows per streamed slice (mult of pack)
    if tile_rows >= INNER:
        tile_rows = (tile_rows // INNER) * INNER
        inner_rows = INNER
    else:
        inner_rows = tile_rows
    n_inner = tile_rows // inner_rows

    n_tiles = pl.cdiv(rows, tile_rows)
    n_par = max(1, min(num_parallel, n_tiles))
    tiles_per_chunk = pl.cdiv(n_tiles, n_par)
    padded_tiles = n_par * tiles_per_chunk
    needs_mask = (rows % tile_rows != 0) or (padded_tiles != n_tiles)

    if padded_tiles != n_tiles:
        # Some trailing grid steps map past the last tile: clamp the block
        # index (the kernel masks their contribution to zero).
        def in_map(i, k):
            t = i * tiles_per_chunk + k
            return (jnp.minimum(t, n_tiles - 1), 0)
    else:
        def in_map(i, k):
            return (i * tiles_per_chunk + k, 0)

    kernel = functools.partial(
        _sc_loss_kernel,
        rows=rows, tile_rows=tile_rows, inner_rows=inner_rows,
        n_inner=n_inner, tiles_per_chunk=tiles_per_chunk,
        n_tiles=n_tiles, needs_mask=needs_mask)

    cost = pl.CostEstimate(
        flops=5 * rows * F,                       # sub, 2 mul, 2 add per elem
        transcendentals=0,
        bytes_accessed=2 * rows * F * itemsize,   # two streaming reads
    )

    partials = pl.pallas_call(
        kernel,
        out_shape=jax.ShapeDtypeStruct((n_par, 2), jnp.float32),
        grid_spec=pltpu.PrefetchScalarGridSpec(
            num_scalar_prefetch=0,
            grid=(n_par, tiles_per_chunk),
            in_specs=[
                pl.BlockSpec((tile_rows, F), in_map),
                pl.BlockSpec((tile_rows, F), in_map),
            ],
            out_specs=pl.BlockSpec((1, 2), lambda i, k: (i, 0),
                                   memory_space=pltpu.SMEM),
            scratch_shapes=[pltpu.VMEM((inner_rows, F), jnp.float32),
                            pltpu.VMEM((inner_rows, F), jnp.float32)],
        ),
        compiler_params=pltpu.CompilerParams(
            dimension_semantics=("parallel", "arbitrary"),
            vmem_limit_bytes=int(vmem_limit_bytes)),
        cost_estimate=cost,
    )(x2, y2)

    num = jnp.sum(partials[:, 0])
    den = jnp.sum(partials[:, 1])
    # Matches torch.norm(..., p='fro') ratio semantics, incl. NaN/Inf when
    # ||y||_F == 0.  Squared sums accumulate in f32 per chunk; adequate for
    # typical spectrogram sizes (note: very large inputs accumulate f32 error).
    return jnp.sqrt(num) / jnp.sqrt(den)


def _ref_loss(x_mag, y_mag):
    x = x_mag.astype(jnp.float32)
    y = y_mag.astype(jnp.float32)
    return jnp.linalg.norm((y - x).ravel()) / jnp.linalg.norm(y.ravel())


if __name__ == "__main__":
    key = jax.random.PRNGKey(0)
    k1, k2, k3, k4, k5, k6 = jax.random.split(key, 6)

    # --- Test 1: main path (f32, single tile, no masking) -------------------
    B, T, F = 2, 16, 128
    x_mag = jnp.abs(jax.random.normal(k1, (B, T, F), dtype=jnp.float32))
    y_mag = jnp.abs(jax.random.normal(k2, (B, T, F), dtype=jnp.float32))
    loss = jax.block_until_ready(spectral_convergence_loss(x_mag, y_mag))
    ref = _ref_loss(x_mag, y_mag)
    assert jnp.allclose(loss, ref, rtol=1e-5, atol=1e-6), (loss, ref)

    # --- Test 2: non-128-multiple freq bins (513), ragged rows, multi-tile,
    #             parallel chunks with clamped padding steps --------------------
    B2, T2, F2 = 3, 17, 513                       # rows = 51 (ragged), F lane-padded
    xa = jnp.abs(jax.random.normal(k3, (B2, T2, F2), dtype=jnp.float32))
    ya = jnp.abs(jax.random.normal(k4, (B2, T2, F2), dtype=jnp.float32))
    loss2 = jax.block_until_ready(
        spectral_convergence_loss(xa, ya, target_block_bytes=64 * 1024,
                                  num_parallel=2))
    ref2 = _ref_loss(xa, ya)
    assert jnp.allclose(loss2, ref2, rtol=1e-5, atol=1e-6), (loss2, ref2)

    # --- Test 3: bf16 inputs (halves HBM traffic; f32 accumulation) ---------
    xb = x_mag.astype(jnp.bfloat16)
    yb = y_mag.astype(jnp.bfloat16)
    loss3 = jax.block_until_ready(spectral_convergence_loss(xb, yb))
    ref3 = _ref_loss(xb, yb)
    assert jnp.allclose(loss3, ref3, rtol=1e-3, atol=1e-5), (loss3, ref3)

    # --- Test 4: multi-slice inner streaming loop + masked tail rows --------
    B4, T4, F4 = 4, 127, 128                      # rows = 508, tile = 512, 4 inner slices
    xc = jnp.abs(jax.random.normal(k5, (B4, T4, F4), dtype=jnp.float32))
    yc = jnp.abs(jax.random.normal(k6, (B4, T4, F4), dtype=jnp.float32))
    loss4 = jax.block_until_ready(
        spectral_convergence_loss(xc, yc, target_block_bytes=512 * 1024))
    ref4 = _ref_loss(xc, yc)
    assert jnp.allclose(loss4, ref4, rtol=1e-5, atol=1e-6), (loss4, ref4)

    print("KERNEL_OK")
</pallas_src>

<mosaic_0001>
module attributes {stable_mosaic.version = 11 : i64} {
  func.func @_sc_loss_kernel(%arg0: i32, %arg1: i32, %arg2: memref<32x128xf32, #tpu.memory_space<vmem>>, %arg3: memref<32x128xf32, #tpu.memory_space<vmem>>, %arg4: memref<1x2xf32, #tpu.memory_space<smem>>, %arg5: memref<32x128xf32, #tpu.memory_space<vmem>>, %arg6: memref<32x128xf32, #tpu.memory_space<vmem>>) attributes {dimension_semantics = [#tpu.dimension_semantics<parallel>, #tpu.dimension_semantics<arbitrary>], iteration_bounds = array<i64: 1, 1>, scalar_prefetch = 0 : i64, scratch_operands = 2 : i64, tpu.core_type = #tpu.core_type<tc>, window_params = [{transform_indices = @transform_0, window_bounds = array<i64: 32, 128>}, {transform_indices = @transform_1, window_bounds = array<i64: 32, 128>}, {transform_indices = @transform_2, window_bounds = array<i64: 1, 2>}]} {
    %c0_i32 = arith.constant 0 : i32
    %0 = arith.cmpi eq, %arg1, %c0_i32 : i32
    %1 = arith.extui %0 : i1 to i32
    %c0_i32_0 = arith.constant 0 : i32
    %2 = arith.cmpi ne, %1, %c0_i32_0 : i32
    scf.if %2 {
      %cst = arith.constant 0.000000e+00 : f32
      %17 = vector.broadcast %cst : f32 to vector<32x128xf32>
      %c0_14 = arith.constant 0 : index
      %c0_15 = arith.constant 0 : index
      %18 = vector.load %arg5[%c0_14, %c0_15] : memref<32x128xf32, #tpu.memory_space<vmem>>, vector<32x128xf32>
      tpu.vector_store %arg5[%c0_14, %c0_15], %17 {strides = array<i32>} : memref<32x128xf32, #tpu.memory_space<vmem>>, vector<32x128xf32>,
      %cst_16 = arith.constant 0.000000e+00 : f32
      %19 = vector.broadcast %cst_16 : f32 to vector<32x128xf32>
      %c0_17 = arith.constant 0 : index
      %c0_18 = arith.constant 0 : index
      %20 = vector.load %arg6[%c0_17, %c0_18] : memref<32x128xf32, #tpu.memory_space<vmem>>, vector<32x128xf32>
      tpu.vector_store %arg6[%c0_17, %c0_18], %19 {strides = array<i32>} : memref<32x128xf32, #tpu.memory_space<vmem>>, vector<32x128xf32>,
    } else {
    }
    %c0 = arith.constant 0 : index
    %c0_1 = arith.constant 0 : index
    %3 = vector.load %arg2[%c0, %c0_1] : memref<32x128xf32, #tpu.memory_space<vmem>>, vector<32x128xf32>
    %c0_2 = arith.constant 0 : index
    %c0_3 = arith.constant 0 : index
    %4 = vector.load %arg3[%c0_2, %c0_3] : memref<32x128xf32, #tpu.memory_space<vmem>>, vector<32x128xf32>
    %5 = arith.subf %4, %3 : vector<32x128xf32>
    %c0_4 = arith.constant 0 : index
    %c0_5 = arith.constant 0 : index
    %6 = vector.load %arg5[%c0_4, %c0_5] : memref<32x128xf32, #tpu.memory_space<vmem>>, vector<32x128xf32>
    %7 = arith.mulf %5, %5 : vector<32x128xf32>
    %8 = arith.addf %6, %7 : vector<32x128xf32>
    %c0_6 = arith.constant 0 : index
    %c0_7 = arith.constant 0 : index
    %9 = vector.load %arg5[%c0_6, %c0_7] : memref<32x128xf32, #tpu.memory_space<vmem>>, vector<32x128xf32>
    tpu.vector_store %arg5[%c0_6, %c0_7], %8 {strides = array<i32>} : memref<32x128xf32, #tpu.memory_space<vmem>>, vector<32x128xf32>,
    %c0_8 = arith.constant 0 : index
    %c0_9 = arith.constant 0 : index
    %10 = vector.load %arg6[%c0_8, %c0_9] : memref<32x128xf32, #tpu.memory_space<vmem>>, vector<32x128xf32>
    %11 = arith.mulf %4, %4 : vector<32x128xf32>
    %12 = arith.addf %10, %11 : vector<32x128xf32>
    %c0_10 = arith.constant 0 : index
    %c0_11 = arith.constant 0 : index
    %13 = vector.load %arg6[%c0_10, %c0_11] : memref<32x128xf32, #tpu.memory_space<vmem>>, vector<32x128xf32>
    tpu.vector_store %arg6[%c0_10, %c0_11], %12 {strides = array<i32>} : memref<32x128xf32, #tpu.memory_space<vmem>>, vector<32x128xf32>,
    %c0_i32_12 = arith.constant 0 : i32
    %14 = arith.cmpi eq, %arg1, %c0_i32_12 : i32
    %15 = arith.extui %14 : i1 to i32
    %c0_i32_13 = arith.constant 0 : i32
    %16 = arith.cmpi ne, %15, %c0_i32_13 : i32
    scf.if %16 {
      %c0_14 = arith.constant 0 : index
      %c0_15 = arith.constant 0 : index
      %17 = vector.load %arg5[%c0_14, %c0_15] : memref<32x128xf32, #tpu.memory_space<vmem>>, vector<32x128xf32>
      %18 = vector.shape_cast %17 : vector<32x128xf32> to vector<1x32x128xf32>
      %cst = arith.constant dense<0.000000e+00> : vector<1xf32>
      %19 = vector.multi_reduction <add>, %18, %cst [1, 2] : vector<1x32x128xf32> to vector<1xf32>
      %20 = vector.shape_cast %19 : vector<1xf32> to vector<1x1x1xf32>
      %21 = vector.extract %20[0, 0, 0] : f32 from vector<1x1x1xf32>
      %c0_16 = arith.constant 0 : index
      %c0_17 = arith.constant 0 : index
      %22 = memref.load %arg4[%c0_16, %c0_17] : memref<1x2xf32, #tpu.memory_space<smem>>
      memref.store %21, %arg4[%c0_16, %c0_17] : memref<1x2xf32, #tpu.memory_space<smem>>
      %c0_18 = arith.constant 0 : index
      %c0_19 = arith.constant 0 : index
      %23 = vector.load %arg6[%c0_18, %c0_19] : memref<32x128xf32, #tpu.memory_space<vmem>>, vector<32x128xf32>
      %24 = vector.shape_cast %23 : vector<32x128xf32> to vector<1x32x128xf32>
      %cst_20 = arith.constant dense<0.000000e+00> : vector<1xf32>
      %25 = vector.multi_reduction <add>, %24, %cst_20 [1, 2] : vector<1x32x128xf32> to vector<1xf32>
      %26 = vector.shape_cast %25 : vector<1xf32> to vector<1x1x1xf32>
      %27 = vector.extract %26[0, 0, 0] : f32 from vector<1x1x1xf32>
      %c0_21 = arith.constant 0 : index
      %c1 = arith.constant 1 : index
      %28 = memref.load %arg4[%c0_21, %c1] : memref<1x2xf32, #tpu.memory_space<smem>>
      memref.store %27, %arg4[%c0_21, %c1] : memref<1x2xf32, #tpu.memory_space<smem>>
    } else {
    }
    return
  }
  func.func @transform_0(%arg0: i32, %arg1: i32) -> (i32, i32) {
    %c1_i32 = arith.constant 1 : i32
    %0 = arith.muli %arg0, %c1_i32 : i32
    %1 = arith.addi %0, %arg1 : i32
    %c0_i32 = arith.constant 0 : i32
    %c0_i32_0 = arith.constant 0 : i32
    return %1, %c0_i32 : i32, i32
  }
  func.func @transform_1(%arg0: i32, %arg1: i32) -> (i32, i32) {
    %c1_i32 = arith.constant 1 : i32
    %0 = arith.muli %arg0, %c1_i32 : i32
    %1 = arith.addi %0, %arg1 : i32
    %c0_i32 = arith.constant 0 : i32
    %c0_i32_0 = arith.constant 0 : i32
    return %1, %c0_i32 : i32, i32
  }
  func.func @transform_2(%arg0: i32, %arg1: i32) -> (i32, i32) {
    %c0_i32 = arith.constant 0 : i32
    %c0_i32_0 = arith.constant 0 : i32
    return %arg0, %c0_i32 : i32, i32
  }
}

</mosaic_0001>

<llo_original>
// kernel: tpu_custom_call.1
$region0: #{tpu_custom_call.1}
  #allocation0 [shape = 'u32[]', space=smem, size = 0x4, offset = 0x4, fixed_abs, tag = 'smem constant byte address 0x4 - core index']
  #allocation1 [shape = 'u32[144,128]{1,0:T(1,128)}', space=vmem, size = 0x12000, scoped, tag = 'internal scratch']
  #allocation2 [shape = 'f32[32,128]{1,0:T(8,128)}', space=vmem, size = 0x4000, scoped, tag = 'scratch operand']
  #allocation3 [shape = 'f32[32,128]{1,0:T(8,128)}', space=vmem, size = 0x4000, scoped, tag = 'scratch operand']
  %s0 = inlined_call_operand.hbm [shape: f32[32,128], index: 0, kind: input, shape index: {}]
  %s1 = inlined_call_operand.hbm [shape: f32[32,128], index: 1, kind: input, shape index: {}]
  %s2 = inlined_call_operand.hbm [shape: f32[1,2], index: 2, kind: output, shape index: {}]
  %s3 = sld [smem:[#allocation0]]
  $region34: #{tpu_custom_call.1} parent=0
    _
  %s5 = ssub.s32 1, %s3
  %s6 = scalar_select 0, %s5, %s3
  $region1: #{tpu_custom_call.1} parent=0
    #allocation4 [shape = 'u8[16384]{0}', space=vmem, size = 0x4000, scoped, tag = 'input window, operand 0, single buffered']
    #allocation5 [shape = 's32[1]{0}', space=sflag, size = 0x4, scoped, tag = 'scoped memory for tpu_custom_call.1']
    #allocation6 [shape = 's32[1]{0}', space=sflag, size = 0x4, scoped, tag = 'scoped memory for tpu_custom_call.1']
    #allocation7 [shape = 'u8[16384]{0}', space=vmem, size = 0x4000, scoped, tag = 'input window, operand 1, single buffered']
    #allocation8 [shape = 's32[1]{0}', space=sflag, size = 0x4, scoped, tag = 'scoped memory for tpu_custom_call.1']
    #allocation9 [shape = 'u8[512]{0}', space=smem, size = 0x200, scoped, tag = 'output window, operand 0, single buffered']
    %7 = vsyncpa [#allocation5], 0
    %8 = vsyncpa [#allocation8], 0
    %9 = vsyncpa [#allocation6], 0
    // Predicated region
    $region2: #{tpu_custom_call.1} parent=1 // pred_check
      _
    $region3: #{tpu_custom_call.1} parent=1 // pred_check_branch
      %11 = sbr.rel (0) target = $region5
    $region4: #{tpu_custom_call.1} parent=1 // pred_region
      %s12 = sadd.s32 0, 0
      %s13 = smul.u32 4, %s12
      %s15 = ssub.s32 512, 512
      %16 = vsyncadd [#allocation5], %s15
      %s17 = smul.addr %s13, 128
      %s18 = scalar_lea.hbm %s0, %s17
      %s19 = sshll.u32 [#allocation4], 4
      %s20 = int_to_ptr.vmem [resolvable:$true] %s19
      %25 = dma.hbm_to_vmem [thread:$0]  %s18, 512, %s20, [#allocation5], 128, 128, 8
    $region5: #{tpu_custom_call.1} parent=1 // pred_fallthru
      _
    // Predicated region
    $region6: #{tpu_custom_call.1} parent=1 // pred_check
      _
    $region7: #{tpu_custom_call.1} parent=1 // pred_check_branch
      %27 = sbr.rel (0) target = $region9
    $region8: #{tpu_custom_call.1} parent=1 // pred_region
      %s28 = sadd.s32 0, 0
      %s29 = smul.u32 4, %s28
      %s31 = ssub.s32 512, 512
      %32 = vsyncadd [#allocation8], %s31
      %s33 = smul.addr %s29, 128
      %s34 = scalar_lea.hbm %s1, %s33
      %s35 = sshll.u32 [#allocation7], 4
      %s36 = int_to_ptr.vmem [resolvable:$true] %s35
      %41 = dma.hbm_to_vmem [thread:$0]  %s34, 512, %s36, [#allocation8], 128, 128, 8
    $region9: #{tpu_custom_call.1} parent=1 // pred_fallthru
      _
    // Predicated region
    $region10: #{tpu_custom_call.1} parent=1 // pred_check
      _
    $region11: #{tpu_custom_call.1} parent=1 // pred_check_branch
      %43 = sbr.rel (0) target = $region13
    $region12: #{tpu_custom_call.1} parent=1 // pred_region
      %44 = dma.done [#allocation5], 512
    $region13: #{tpu_custom_call.1} parent=1 // pred_fallthru
      _
    // Predicated region
    $region14: #{tpu_custom_call.1} parent=1 // pred_check
      _
    $region15: #{tpu_custom_call.1} parent=1 // pred_check_branch
      %46 = sbr.rel (0) target = $region17
    $region16: #{tpu_custom_call.1} parent=1 // pred_region
      %47 = dma.done [#allocation8], 512
    $region17: #{tpu_custom_call.1} parent=1 // pred_fallthru
      _
    %s48 = sadd.s32 0, 0
    %s49 = smul.u32 4, %s48
    %s50 = sadd.s32 0, 0
    %s51 = smul.u32 4, %s50
    %p52 = scmp.eq.s32.totalorder 0, 0
    // Predicated region
    $region18: #{tpu_custom_call.1} parent=1 // pred_check
      %p53 = pneg %p52
    $region19: #{tpu_custom_call.1} parent=1 // pred_check_branch
      %55 = sbr.rel (%p53) target = $region21
    $region20: #{tpu_custom_call.1} parent=1 // pred_region
      %56 = vst [vmem:[#allocation2] sm:$0xff] 0.0
      %57 = vst [vmem:[#allocation2 + $0x8] sm:$0xff] 0.0
      %58 = vst [vmem:[#allocation2 + $0x10] sm:$0xff] 0.0
      %59 = vst [vmem:[#allocation2 + $0x18] sm:$0xff] 0.0
      %60 = vst [vmem:[#allocation3] sm:$0xff] 0.0
      %61 = vst [vmem:[#allocation3 + $0x8] sm:$0xff] 0.0
      %62 = vst [vmem:[#allocation3 + $0x10] sm:$0xff] 0.0
      %63 = vst [vmem:[#allocation3 + $0x18] sm:$0xff] 0.0
    $region21: #{tpu_custom_call.1} parent=1 // pred_fallthru
      _
    %v64 = vld [vmem:[#allocation4] sm:$0xff]
    %v65 = vld [vmem:[#allocation4 + $0x8] sm:$0xff]
    %v66 = vld [vmem:[#allocation4 + $0x10] sm:$0xff]
    %v67 = vld [vmem:[#allocation4 + $0x18] sm:$0xff]
    %v68 = vld [vmem:[#allocation7] sm:$0xff]
    %v69 = vld [vmem:[#allocation7 + $0x8] sm:$0xff]
    %v70 = vld [vmem:[#allocation7 + $0x10] sm:$0xff]
    %v71 = vld [vmem:[#allocation7 + $0x18] sm:$0xff]
    %v72 = vsub.f32 %v68, %v64
    %v73 = vsub.f32 %v69, %v65
    %v74 = vsub.f32 %v70, %v66
    %v75 = vsub.f32 %v71, %v67
    %v76 = vld [vmem:[#allocation2] sm:$0xff]
    %v77 = vld [vmem:[#allocation2 + $0x8] sm:$0xff]
    %v78 = vld [vmem:[#allocation2 + $0x10] sm:$0xff]
    %v79 = vld [vmem:[#allocation2 + $0x18] sm:$0xff]
    %v80 = vmul.f32 %v72, %v72
    %v81 = vmul.f32 %v73, %v73
    %v82 = vmul.f32 %v74, %v74
    %v83 = vmul.f32 %v75, %v75
    %v84 = vadd.f32 %v76, %v80
    %v85 = vadd.f32 %v77, %v81
    %v86 = vadd.f32 %v78, %v82
    %v87 = vadd.f32 %v79, %v83
    %88 = vst [vmem:[#allocation2] sm:$0xff] %v84
    %89 = vst [vmem:[#allocation2 + $0x8] sm:$0xff] %v85
    %90 = vst [vmem:[#allocation2 + $0x10] sm:$0xff] %v86
    %91 = vst [vmem:[#allocation2 + $0x18] sm:$0xff] %v87
    %v92 = vld [vmem:[#allocation3] sm:$0xff]
    %v93 = vld [vmem:[#allocation3 + $0x8] sm:$0xff]
    %v94 = vld [vmem:[#allocation3 + $0x10] sm:$0xff]
    %v95 = vld [vmem:[#allocation3 + $0x18] sm:$0xff]
    %v96 = vmul.f32 %v68, %v68
    %v97 = vmul.f32 %v69, %v69
    %v98 = vmul.f32 %v70, %v70
    %v99 = vmul.f32 %v71, %v71
    %v100 = vadd.f32 %v92, %v96
    %v101 = vadd.f32 %v93, %v97
    %v102 = vadd.f32 %v94, %v98
    %v103 = vadd.f32 %v95, %v99
    %104 = vst [vmem:[#allocation3] sm:$0xff] %v100
    %105 = vst [vmem:[#allocation3 + $0x8] sm:$0xff] %v101
    %106 = vst [vmem:[#allocation3 + $0x10] sm:$0xff] %v102
    %107 = vst [vmem:[#allocation3 + $0x18] sm:$0xff] %v103
    // Predicated region
    $region22: #{tpu_custom_call.1} parent=1 // pred_check
      %p108 = pneg %p52
    $region23: #{tpu_custom_call.1} parent=1 // pred_check_branch
      %110 = sbr.rel (%p108) target = $region25
    $region24: #{tpu_custom_call.1} parent=1 // pred_region
      %v111 = vld [vmem:[#allocation2] sm:$0xff]
      %v112 = vld [vmem:[#allocation2 + $0x8] sm:$0xff]
      %v113 = vld [vmem:[#allocation2 + $0x10] sm:$0xff]
      %v114 = vld [vmem:[#allocation2 + $0x18] sm:$0xff]
      %v115 = vadd.f32 %v111, %v112
      %v116 = vadd.f32 %v115, %v113
      %v117 = vadd.f32 %v116, %v114
      %118 = vadd.xlane.f32.xlu0 %v117
      %v119 = vpop.xlane.xlu0 %118
      %v120 = vrot.slane %v119, 4
      %v121 = vadd.f32 %v119, %v120
      %v122 = vrot.slane %v121, 2
      %v123 = vadd.f32 %v121, %v122
      %v124 = vrot.slane %v123, 1
      %v125 = vadd.f32 %v123, %v124
      %s126 = vtos %v125
      %s127 = scalar_lea.smem [#allocation9], 0
      %128 = sst [smem:[%s127]] %s126
      %v129 = vld [vmem:[#allocation3] sm:$0xff]
      %v130 = vld [vmem:[#allocation3 + $0x8] sm:$0xff]
      %v131 = vld [vmem:[#allocation3 + $0x10] sm:$0xff]
      %v132 = vld [vmem:[#allocation3 + $0x18] sm:$0xff]
      %v133 = vadd.f32 %v129, %v130
      %v134 = vadd.f32 %v133, %v131
      %v135 = vadd.f32 %v134, %v132
      %136 = vadd.xlane.f32.xlu0 %v135
      %v137 = vpop.xlane.xlu0 %136
      %v138 = vrot.slane %v137, 4
      %v139 = vadd.f32 %v137, %v138
      %v140 = vrot.slane %v139, 2
      %v141 = vadd.f32 %v139, %v140
      %v142 = vrot.slane %v141, 1
      %v143 = vadd.f32 %v141, %v142
      %s144 = vtos %v143
      %s145 = scalar_lea.smem [#allocation9], 1
      %146 = sst [smem:[%s145]] %s144
    $region25: #{tpu_custom_call.1} parent=1 // pred_fallthru
      _
    // Predicated region
    $region26: #{tpu_custom_call.1} parent=1 // pred_check
      _
    $region27: #{tpu_custom_call.1} parent=1 // pred_check_branch
      %148 = sbr.rel (0) target = $region29
    $region28: #{tpu_custom_call.1} parent=1 // pred_region
      %s150 = ssub.s32 16, 16
      %151 = vsyncadd [#allocation6], %s150
      %154 = dma.smem_to_hbm [#allocation9], 16, %s2, [#allocation6]
    $region29: #{tpu_custom_call.1} parent=1 // pred_fallthru
      _
    // Predicated region
    $region30: #{tpu_custom_call.1} parent=1 // pred_check
      _
    $region31: #{tpu_custom_call.1} parent=1 // pred_check_branch
      %156 = sbr.rel (0) target = $region33
    $region32: #{tpu_custom_call.1} parent=1 // pred_region
      %157 = dma.done [#allocation6], 16
    $region33: #{tpu_custom_call.1} parent=1 // pred_fallthru
      _
    %158 = sfence
    %159 = vsyncpa [#allocation5], 1
    %160 = vsyncpa [#allocation8], 1
    %161 = vsyncpa [#allocation6], 1

</llo_original>
